<compile_context>
chip_gen: v6e
topology: v6e:2x2x1
jax: 0.10.0
libtpu: 0.0.40
codegen_flags: <defaults>
</compile_context>

<pallas_src>
import functools

import jax
import jax.numpy as jnp
from jax.experimental import pallas as pl
from jax.experimental.pallas import tpu as pltpu


def _dma_copy_kernel(x_hbm, o_hbm, sem, *, slices):
    """HBM -> HBM copy via chunked async DMAs (no VMEM round trip)."""
    if slices is None:
        cp = pltpu.make_async_copy(x_hbm, o_hbm, sem.at[0])
        cp.start()
        cp.wait()
        return
    copies = []
    for j, (start, size) in enumerate(slices):
        cp = pltpu.make_async_copy(
            x_hbm.at[pl.ds(start, size)],
            o_hbm.at[pl.ds(start, size)],
            sem.at[j],
        )
        cp.start()              # issue every chunk first ...
        copies.append(cp)
    for cp in copies:           # ... then drain; DMA engines overlap.
        cp.wait()


def _plan_chunks(dim0, nbytes, max_chunks, min_chunk_bytes):
    """Static (start, size) slices along axis 0, or None for one full DMA."""
    if dim0 <= 1 or nbytes < 2 * min_chunk_bytes:
        return None
    k = int(min(max_chunks, dim0, max(1, nbytes // min_chunk_bytes)))
    base, rem = divmod(dim0, k)
    slices, start = [], 0
    for j in range(k):
        size = base + (1 if j < rem else 0)
        slices.append((start, size))
        start += size
    return slices


def identity(x: jax.Array, *, materialize: bool = False,
             max_chunks: int = 8, min_chunk_bytes: int = 1 << 20) -> jax.Array:
    """Identity forward pass.

    Default: `return x` -- exactly the module's forward, zero cost (no HBM
    read/write, no launch).  With `materialize=True`, returns a fresh buffer
    produced by a grid-free HBM->HBM DMA copy kernel that handles any shape
    (including ragged / narrow-last-dim tensors) without padding, reshaping,
    or VMEM staging.
    """
    if not materialize:
        # nn.Identity.forward is literally `return x`; aliasing is safe.
        return x

    if x.ndim == 0 or x.size == 0:
        # Nothing to slice/DMA; the forward is still just `x`.
        return x

    nbytes = x.size * jnp.dtype(x.dtype).itemsize
    slices = _plan_chunks(x.shape[0], nbytes, max_chunks, min_chunk_bytes)
    n_sems = len(slices) if slices is not None else 1

    return pl.pallas_call(
        functools.partial(_dma_copy_kernel, slices=slices),
        out_shape=jax.ShapeDtypeStruct(x.shape, x.dtype),
        in_specs=[pl.BlockSpec(memory_space=pl.ANY)],
        out_specs=pl.BlockSpec(memory_space=pl.ANY),
        scratch_shapes=[pltpu.SemaphoreType.DMA((n_sems,))],
        cost_estimate=pl.CostEstimate(
            flops=0, transcendentals=0, bytes_accessed=2 * nbytes),
    )(x)


if __name__ == "__main__":
    key = jax.random.PRNGKey(0)
    k1, k2, k3 = jax.random.split(key, 3)

    # Default path: exactly the module's forward (zero-cost alias).
    x = jax.random.normal(k1, (2, 4, 16, 16), dtype=jnp.float32)
    y = jax.block_until_ready(identity(x))
    assert y.shape == x.shape and y.dtype == x.dtype
    assert bool(jnp.all(y == x))

    # Materialized copy via the HBM->HBM DMA kernel.  The narrow (16-wide)
    # last dim is fine: nothing is staged in VMEM, so no lane-width rules.
    y1 = jax.block_until_ready(identity(x, materialize=True))
    assert y1.shape == x.shape and y1.dtype == x.dtype
    assert bool(jnp.all(y1 == x))

    # Ragged total size (not a multiple of 128) -- same kernel, no fallback.
    x2 = jax.random.normal(k2, (3, 5, 7), dtype=jnp.float32)
    y2 = jax.block_until_ready(identity(x2, materialize=True))
    assert y2.shape == x2.shape and y2.dtype == x2.dtype
    assert bool(jnp.all(y2 == x2))

    # Modest tensor forced through the multi-chunk (concurrent-DMA) path.
    x3 = jax.random.normal(k3, (8, 32, 128), dtype=jnp.float32)  # 128 KiB
    y3 = jax.block_until_ready(
        identity(x3, materialize=True, min_chunk_bytes=16 << 10))
    assert y3.shape == x3.shape and y3.dtype == x3.dtype
    assert bool(jnp.all(y3 == x3))

    print("KERNEL_OK")
</pallas_src>

<mosaic_0001>
module attributes {stable_mosaic.version = 11 : i64} {
  func.func @_dma_copy_kernel(%arg0: memref<2x4x16x16xf32, #tpu.memory_space<any>>, %arg1: memref<2x4x16x16xf32, #tpu.memory_space<any>>, %arg2: memref<1x!tpu.dma_semaphore, #tpu.memory_space<semaphore_mem>>) attributes {dimension_semantics = [], scalar_prefetch = 0 : i64, scratch_operands = 1 : i64, tpu.core_type = #tpu.core_type<tc>} {
    %c0_i32 = arith.constant 0 : i32
    %0 = tpu.memref_slice %arg2[%c0_i32] : memref<1x!tpu.dma_semaphore, #tpu.memory_space<semaphore_mem>> -> memref<1x!tpu.dma_semaphore, #tpu.memory_space<semaphore_mem>>
    %1 = tpu.memref_squeeze %0 : memref<1x!tpu.dma_semaphore, #tpu.memory_space<semaphore_mem>> -> memref<!tpu.dma_semaphore, #tpu.memory_space<semaphore_mem>>
    tpu.enqueue_dma source(%arg0 : memref<2x4x16x16xf32, #tpu.memory_space<any>>) target(%arg1 : memref<2x4x16x16xf32, #tpu.memory_space<any>>) target_semaphore(%1 : memref<!tpu.dma_semaphore, #tpu.memory_space<semaphore_mem>>)
    %c0_i32_0 = arith.constant 0 : i32
    %2 = tpu.memref_slice %arg2[%c0_i32_0] : memref<1x!tpu.dma_semaphore, #tpu.memory_space<semaphore_mem>> -> memref<1x!tpu.dma_semaphore, #tpu.memory_space<semaphore_mem>>
    %3 = tpu.memref_squeeze %2 : memref<1x!tpu.dma_semaphore, #tpu.memory_space<semaphore_mem>> -> memref<!tpu.dma_semaphore, #tpu.memory_space<semaphore_mem>>
    tpu.wait_dma2 semaphore(%3 : memref<!tpu.dma_semaphore, #tpu.memory_space<semaphore_mem>>) src(%arg0 : memref<2x4x16x16xf32, #tpu.memory_space<any>>) dst(%arg1 : memref<2x4x16x16xf32, #tpu.memory_space<any>>)
    return
  }
}

</mosaic_0001>

<llo_original>
// kernel: tpu_custom_call.1
$region0: #{tpu_custom_call.1}
  #allocation0 [shape = 'u32[]', space=smem, size = 0x4, offset = 0x4, fixed_abs, tag = 'smem constant byte address 0x4 - core index']
  #allocation1 [shape = 'u32[144,128]{1,0:T(1,128)}', space=vmem, size = 0x12000, scoped, tag = 'internal scratch']
  #allocation2 [shape = 's32[1]{0}', space=sflag, size = 0x4, scoped, tag = 'scratch operand']
  #allocation3 [shape = 's32[]', space=sflag, size = 0x4, offset = 0, fixed_abs, tag = 'sflag constant byte address 0x0 - dummy sync flag']
  #allocation4 [shape = 'u32[0]{0}', space=smem, size = 0, offset = 0, fixed_abs, tag = 'smem constant byte address 0x0 - null']
  %s0 = inlined_call_operand.hbm [shape: f32[2,4,16,16], index: 0, kind: input, shape index: {}]
  %s1 = inlined_call_operand.hbm [shape: f32[2,4,16,16], index: 1, kind: output, shape index: {}]
  %s2 = sld [smem:[#allocation0]]
  $region2: #{tpu_custom_call.1} parent=0
    _
  %s4 = ssub.s32 1, %s2
  %s5 = scalar_select 0, %s4, %s2
  %s7 = sshll.u32 1, 14
  %s8 = sxor.u32 4294967295, %s7
  %12 = dma.general %s0, 2048, %s1, [#allocation2], 131072, [#allocation4], 0, 0
  %s13 = smul.u32 2, 4
  %s14 = smul.u32 %s13, 16
  %s15 = smul.u32 %s14, 1
  %s16 = sshll.u32 %s15, 4
  %17 = dma.done [#allocation2], %s16
  %18 = vsyncmov [#allocation2]
  %s19 = vpop.sfrf %18
  %p20 = scmp.eq.s32.totalorder %s19, 0
  %p21 = pneg %p20
  %23 = shalt.err (%p21)

</llo_original>
